<compile_context>
chip_gen: v6e
topology: v6e:2x2x1
jax: 0.10.0
libtpu: 0.0.40
codegen_flags: <defaults>
</compile_context>

<pallas_src>
import math
import jax
import jax.numpy as jnp
from jax.experimental import pallas as pl
from jax.experimental.pallas import tpu as pltpu

# ----------------------------- config (small synthetic sizes) -----------------------------
D_MODEL = 32
D_K = 8
D_V = 8
H = 4
D_FF = 64
N_LAYERS = 2
DIM_G = 64           # fixed in the module: nn.Linear(64, 1) per head
PADDING_IDX = 0
LN_EPS = 1e-5
NEG_BIG = -1e9       # finite mask sentinel (avoids -inf -> NaN on fully-masked rows)

# packed parameter slab widths
W1_SLAB = 2 * H * D_K + H * D_V + D_MODEL + D_FF   # [Wq|Wk | Wv | Wo | W1] = 64+32+32+64 = 192
B_SLAB = 8 * D_MODEL                               # bias/LN slab lane width = 256


# ----------------------------- Pallas kernel 1: WG projection (log-space, lane-dense) -----
def _wg_kernel(wt_ref, b_ref, embt_ref, out_ref):
    # wt: (H, 64), b: (H, 1), emb_t: (64, TM) -> out: (H, TM)
    # log(clamp(relu(w @ e + b), 1e-6)) == log(max(w @ e + b, 1e-6))  (hoisted out of layers)
    y = jnp.dot(wt_ref[...], embt_ref[...], preferred_element_type=jnp.float32) + b_ref[...]
    out_ref[...] = jnp.log(jnp.maximum(y, 1e-6))


def geometry_log_weights(emb_t, wg_wt, wg_b, *, tile_m=1024):
    # emb_t: (64, M) with M = S*S (batch-deduplicated). Output is lane-dense (H, M), log-space.
    K, M = emb_t.shape
    tm = min(M, tile_m)
    return pl.pallas_call(
        _wg_kernel,
        out_shape=jax.ShapeDtypeStruct((H, M), jnp.float32),
        grid=(pl.cdiv(M, tm),),
        in_specs=[
            pl.BlockSpec((H, K), lambda i: (0, 0)),
            pl.BlockSpec((H, 1), lambda i: (0, 0)),
            pl.BlockSpec((K, tm), lambda i: (0, i)),
        ],
        out_specs=pl.BlockSpec((H, tm), lambda i: (0, i)),
        compiler_params=pltpu.CompilerParams(dimension_semantics=("parallel",)),
    )(wg_wt, wg_b, emb_t)


# ----------------------------- Pallas kernel 2: fused N-layer encoder stack ---------------
def _encoder_stack_kernel(x_ref, pos_ref, geom_ref, mask_ref,
                          w1_ref, w2_ref, b_ref, out_ref, o_scr):
    n_layers = w1_ref.shape[0]
    D = D_MODEL

    x = x_ref[0]                    # (S, D)
    pos = pos_ref[0]                # (S, D)
    mask_row = mask_ref[0]          # (1, S); 1.0 where key position is padding

    # log-geometry bias is layer-invariant: fold the key-padding mask in once, up front.
    geom_m = geom_ref[...] + jnp.where(mask_row > 0.5, NEG_BIG, 0.0)   # (H, S, S)
    scale = jnp.float32(1.0 / math.sqrt(D_K))

    def layer_norm(z, g, b):
        mu = jnp.mean(z, axis=-1, keepdims=True)
        var = jnp.mean((z - mu) ** 2, axis=-1, keepdims=True)
        return (z - mu) * jax.lax.rsqrt(var + LN_EPS) * g + b

    def split_heads(t, d):
        # (S, H*d) -> (H, S, d) via static lane slices stacked along a new major axis
        # (avoids lane<->sublane reshapes inside the kernel).
        return jnp.stack([t[:, h * d:(h + 1) * d] for h in range(H)], axis=0)

    for l in range(n_layers):                 # static unroll; x stays resident in VMEM
        w = w1_ref[l]                         # (D, 192) bf16: [Wq|Wk | Wv | Wo | W1]
        w2 = w2_ref[l]                        # (D_FF, D) bf16
        b = b_ref[l]                          # (2, 256) f32 bias / LN params
        w_qk = w[:, 0:2 * H * D_K]
        w_v = w[:, 2 * H * D_K:2 * H * D_K + H * D_V]
        w_o = w[:, 96:96 + D]
        w_1 = w[:, 128:128 + D_FF]
        bq = b[0:1, 0 * D:1 * D]
        bk = b[0:1, 1 * D:2 * D]
        bv = b[0:1, 2 * D:3 * D]
        bo = b[0:1, 3 * D:4 * D]
        ln1g = b[0:1, 4 * D:5 * D]
        ln1b = b[0:1, 5 * D:6 * D]
        ln2g = b[0:1, 6 * D:7 * D]
        ln2b = b[0:1, 7 * D:8 * D]
        b1 = b[1:2, 0:D_FF]
        b2 = b[1:2, D_FF:D_FF + D]
        ln3g = b[1:2, D_FF + D:D_FF + 2 * D]
        ln3b = b[1:2, D_FF + 2 * D:D_FF + 3 * D]

        xp = x + pos                          # queries / keys get +pos, values do not
        qk = jnp.dot(xp.astype(jnp.bfloat16), w_qk,
                     preferred_element_type=jnp.float32)            # fused Q|K: (S, 64)
        v = jnp.dot(x.astype(jnp.bfloat16), w_v,
                    preferred_element_type=jnp.float32) + bv        # (S, 32)
        q = qk[:, 0:H * D_K] + bq
        k = qk[:, H * D_K:2 * H * D_K] + bk

        qh = split_heads(q, D_K)              # (H, S, D_K)
        kh = split_heads(k, D_K)
        vh = split_heads(v, D_V)

        # all heads in one batched dot_general: (H,S,Dk) x (H,S,Dk) -> (H,S,S)
        att = jax.lax.dot_general(qh, kh, (((2,), (2,)), ((0,), (0,))),
                                  preferred_element_type=jnp.float32) * scale
        w_mn = geom_m + att                   # log(clamp(geom,1e-6)) + masked scores
        w_mn = w_mn - jnp.max(w_mn, axis=-1, keepdims=True)
        e = jnp.exp(w_mn)
        p = e * pl.reciprocal(jnp.sum(e, axis=-1, keepdims=True), approx=True)

        # (H,S,S) x (H,S,Dv) -> (H,S,Dv); merge heads through a VMEM scratch slab
        oh = jax.lax.dot_general(p, vh, (((2,), (1,)), ((0,), (0,))),
                                 preferred_element_type=jnp.float32)
        for h in range(H):
            o_scr[:, h * D_V:(h + 1) * D_V] = oh[h]
        o = o_scr[...]                        # (S, H*Dv)

        attn = jnp.dot(o.astype(jnp.bfloat16), w_o,
                       preferred_element_type=jnp.float32) + bo

        att_ln = layer_norm(xp + attn, ln1g, ln1b)   # MHA-internal residual+LN (with +pos)
        y = layer_norm(x + att_ln, ln2g, ln2b)       # EncoderLayer residual+LN (no pos)
        hdd = jnp.maximum(
            jnp.dot(y.astype(jnp.bfloat16), w_1, preferred_element_type=jnp.float32) + b1,
            0.0)
        ff = jnp.dot(hdd.astype(jnp.bfloat16), w2,
                     preferred_element_type=jnp.float32) + b2
        x = layer_norm(y + ff, ln3g, ln3b)           # input to next layer (kept in VMEM)

    out_ref[0] = x.astype(out_ref.dtype)


def encoder_stack(x, pos, log_geom, mask3, w1_slab, w2_slab, b_slab):
    B, S, D = x.shape
    L = w1_slab.shape[0]
    return pl.pallas_call(
        _encoder_stack_kernel,
        out_shape=jax.ShapeDtypeStruct((B, S, D), x.dtype),
        grid=(B,),
        in_specs=[
            pl.BlockSpec((1, S, D), lambda b: (b, 0, 0)),          # x
            pl.BlockSpec((1, S, D), lambda b: (b, 0, 0)),          # pos
            pl.BlockSpec((H, S, S), lambda b: (0, 0, 0)),          # shared log-geometry bias
            pl.BlockSpec((1, 1, S), lambda b: (b, 0, 0)),          # key-padding mask
            pl.BlockSpec((L, D, W1_SLAB), lambda b: (0, 0, 0)),    # weight slab 1 (bf16)
            pl.BlockSpec((L, D_FF, D), lambda b: (0, 0, 0)),       # FFN W2 slab (bf16)
            pl.BlockSpec((L, 2, B_SLAB), lambda b: (0, 0, 0)),     # bias / LN slab (f32)
        ],
        out_specs=pl.BlockSpec((1, S, D), lambda b: (b, 0, 0)),
        scratch_shapes=[pltpu.VMEM((S, H * D_V), jnp.float32)],
        compiler_params=pltpu.CompilerParams(dimension_semantics=("parallel",)),
    )(x, pos, log_geom, mask3, w1_slab, w2_slab, b_slab)


# ----------------------------- BoxRelationalEmbedding (glue, plain JAX) -------------------
def box_relational_embedding(seq_len, dim_g=DIM_G, wave_len=1000.0):
    # Identical for every batch element -> computed once (batch-deduplicated).
    grid_size = int(math.sqrt(seq_len))
    rng = jnp.arange(grid_size, dtype=jnp.float32)
    px_min = jnp.repeat(rng, grid_size) / grid_size
    py_min = jnp.tile(rng, grid_size) / grid_size
    px_max = px_min + 1.0 / grid_size
    py_max = py_min + 1.0 / grid_size

    cx = (px_min + px_max) * 0.5
    cy = (py_min + py_max) * 0.5
    w = (px_max - px_min) + 1.0
    h = (py_max - py_min) + 1.0

    delta_x = jnp.log(jnp.clip(jnp.abs((cx[:, None] - cx[None, :]) / w[:, None]), 1e-3, None))
    delta_y = jnp.log(jnp.clip(jnp.abs((cy[:, None] - cy[None, :]) / h[:, None]), 1e-3, None))
    delta_w = jnp.log(w[:, None] / w[None, :])
    delta_h = jnp.log(h[:, None] / h[None, :])
    position_mat = jnp.stack([delta_x, delta_y, delta_w, delta_h], axis=-1)   # (S, S, 4)

    feat_range = jnp.arange(dim_g // 8, dtype=jnp.float32)
    dim_mat = 1.0 / (wave_len ** (feat_range / (dim_g / 8.0)))                # (8,)
    mul = 100.0 * position_mat[..., None] * dim_mat                           # (S, S, 4, 8)
    mul = mul.reshape(seq_len, seq_len, dim_g // 2)
    return jnp.concatenate([jnp.sin(mul), jnp.cos(mul)], axis=-1)             # (S, S, 64)


# ----------------------------- MultiLevelEncoder ------------------------------------------
class MultiLevelEncoderPallas:
    def __init__(self, n_layers, padding_idx, key):
        assert H * D_V == D_MODEL and H * D_K == D_MODEL  # required by the slab packing
        self.n_layers = n_layers
        self.padding_idx = padding_idx
        s = 0.02
        keys = jax.random.split(key, 2 + 6 * n_layers)
        kit = iter(keys)

        # WGs: h x Linear(64, 1) fused and stored transposed: (H, 64) weight, (H, 1) bias.
        self.wg_wt = s * jax.random.normal(next(kit), (H, DIM_G), jnp.float32)
        self.wg_b = s * jax.random.normal(next(kit), (H, 1), jnp.float32)

        def lin(k, din, dout):
            return s * jax.random.normal(k, (din, dout), jnp.float32)

        ones32 = jnp.ones((D_MODEL,), jnp.float32)
        zeros = lambda n: jnp.zeros((n,), jnp.float32)

        w1_layers, w2_layers, b_layers = [], [], []
        for _ in range(n_layers):
            wq = lin(next(kit), D_MODEL, H * D_K)
            wk = lin(next(kit), D_MODEL, H * D_K)
            wv = lin(next(kit), D_MODEL, H * D_V)
            wo = lin(next(kit), H * D_V, D_MODEL)
            w1 = lin(next(kit), D_MODEL, D_FF)
            w2 = lin(next(kit), D_FF, D_MODEL)
            w1_layers.append(jnp.concatenate([wq, wk, wv, wo, w1], axis=1))    # (32, 192)
            w2_layers.append(w2)                                               # (64, 32)
            # bias/LN slab: row0 = bq|bk|bv|bo|ln1g|ln1b|ln2g|ln2b ; row1 = b1|b2|ln3g|ln3b|pad
            row0 = jnp.concatenate([zeros(D_MODEL), zeros(D_MODEL), zeros(D_MODEL),
                                    zeros(D_MODEL), ones32, zeros(D_MODEL),
                                    ones32, zeros(D_MODEL)])
            row1 = jnp.concatenate([zeros(D_FF), zeros(D_MODEL), ones32, zeros(D_MODEL),
                                    zeros(B_SLAB - (D_FF + 3 * D_MODEL))])
            b_layers.append(jnp.stack([row0, row1], axis=0))                   # (2, 256)

        # bf16 weights halve DMA bytes / vreg pressure; accumulation stays f32 in-kernel.
        self.w1_slab = jnp.stack(w1_layers).astype(jnp.bfloat16)   # (L, 32, 192)
        self.w2_slab = jnp.stack(w2_layers).astype(jnp.bfloat16)   # (L, 64, 32)
        self.b_slab = jnp.stack(b_layers)                          # (L, 2, 256) f32

    def __call__(self, x, pos):
        bs, seq_len_full = x.shape[:2]
        # attention_mask = (sum(input, -1) == padding_idx).unsqueeze(1).unsqueeze(1)
        pad_mask = (jnp.sum(x, axis=-1) == self.padding_idx).astype(jnp.float32)   # (B, S)

        seq_len = seq_len_full
        iu_xray = math.sqrt(seq_len) != int(math.sqrt(seq_len))
        if iu_xray:
            seq_len = seq_len // 2

        # geometry path: batch-deduplicated, log(clamp(relu(.),1e-6)) hoisted into the kernel
        emb_t = box_relational_embedding(seq_len).reshape(-1, DIM_G).T        # (64, S*S)
        rel = geometry_log_weights(emb_t, self.wg_wt, self.wg_b)              # (H, S*S) log-space
        rel = rel.reshape(H, seq_len, seq_len)

        if iu_xray:
            # original concatenates zeros pre-log; in log space those blocks become log(1e-6)
            neg = jnp.full_like(rel, math.log(1e-6))
            r1 = jnp.concatenate([rel, neg], axis=-2)
            r2 = jnp.concatenate([neg, rel], axis=-2)
            rel = jnp.concatenate([r1, r2], axis=-1)                          # (H, 2s, 2s)

        mask3 = pad_mask[:, None, :]                                          # (B, 1, S)
        out = encoder_stack(x, pos, rel, mask3, self.w1_slab, self.w2_slab, self.b_slab)
        attention_mask = pad_mask.astype(jnp.bool_)[:, None, None, :]         # (B, 1, 1, S)
        return out, attention_mask


# ----------------------------- main --------------------------------------------------------
if __name__ == "__main__":
    key = jax.random.PRNGKey(0)
    k_model, k_x, k_pos = jax.random.split(key, 3)

    bs, seq = 2, 16                       # seq is a perfect square -> grid-features path
    x = jax.random.normal(k_x, (bs, seq, D_MODEL), jnp.float32)
    pos = jax.random.normal(k_pos, (bs, seq, D_MODEL), jnp.float32)

    model = MultiLevelEncoderPallas(N_LAYERS, PADDING_IDX, k_model)
    out, mask = model(x, pos)
    out = jax.block_until_ready(out)
    mask = jax.block_until_ready(mask)

    assert out.shape == (bs, seq, D_MODEL)
    assert mask.shape == (bs, 1, 1, seq)
    assert bool(jnp.all(jnp.isfinite(out)))
    print("KERNEL_OK")
</pallas_src>

<mosaic_0001>
module attributes {stable_mosaic.version = 11 : i64} {
  func.func @_wg_kernel(%arg0: i32, %arg1: memref<4x64xf32, #tpu.memory_space<vmem>>, %arg2: memref<4x1xf32, #tpu.memory_space<vmem>>, %arg3: memref<64x256xf32, #tpu.memory_space<vmem>>, %arg4: memref<4x256xf32, #tpu.memory_space<vmem>>) attributes {dimension_semantics = [#tpu.dimension_semantics<parallel>], iteration_bounds = array<i64: 1>, scalar_prefetch = 0 : i64, scratch_operands = 0 : i64, tpu.core_type = #tpu.core_type<tc>, window_params = [{pipeline_mode = #tpu.pipeline_mode<synchronous>, transform_indices = @transform_0, window_bounds = array<i64: 4, 64>}, {pipeline_mode = #tpu.pipeline_mode<synchronous>, transform_indices = @transform_1, window_bounds = array<i64: 4, 1>}, {transform_indices = @transform_2, window_bounds = array<i64: 64, 256>}, {transform_indices = @transform_3, window_bounds = array<i64: 4, 256>}]} {
    %c0 = arith.constant 0 : index
    %c0_0 = arith.constant 0 : index
    %0 = vector.load %arg1[%c0, %c0_0] : memref<4x64xf32, #tpu.memory_space<vmem>>, vector<4x64xf32>
    %c0_1 = arith.constant 0 : index
    %c0_2 = arith.constant 0 : index
    %1 = vector.load %arg3[%c0_1, %c0_2] : memref<64x256xf32, #tpu.memory_space<vmem>>, vector<64x256xf32>
    %cst = arith.constant dense<0.000000e+00> : vector<4x256xf32>
    %2 = tpu.matmul %0, %1, %cst {dimension_numbers = #tpu.dot_dimension_numbers<[1], [0], [0], [1], [0, 0, 1, 1], [], []>} : vector<4x64xf32>, vector<64x256xf32>, vector<4x256xf32> -> vector<4x256xf32>
    %c0_3 = arith.constant 0 : index
    %c0_4 = arith.constant 0 : index
    %3 = vector.load %arg2[%c0_3, %c0_4] : memref<4x1xf32, #tpu.memory_space<vmem>>, vector<4x1xf32>
    %4 = vector.broadcast %3 : vector<4x1xf32> to vector<4x256xf32>
    %5 = arith.addf %2, %4 : vector<4x256xf32>
    %cst_5 = arith.constant 9.99999997E-7 : f32
    %6 = vector.broadcast %cst_5 : f32 to vector<4x256xf32>
    %7 = arith.maximumf %5, %6 : vector<4x256xf32>
    %8 = math.log %7 : vector<4x256xf32>
    %c0_6 = arith.constant 0 : index
    %c0_7 = arith.constant 0 : index
    %9 = vector.load %arg4[%c0_6, %c0_7] : memref<4x256xf32, #tpu.memory_space<vmem>>, vector<4x256xf32>
    tpu.vector_store %arg4[%c0_6, %c0_7], %8 {strides = array<i32>} : memref<4x256xf32, #tpu.memory_space<vmem>>, vector<4x256xf32>,
    return
  }
  func.func @transform_0(%arg0: i32) -> (i32, i32) {
    %c0_i32 = arith.constant 0 : i32
    %c0_i32_0 = arith.constant 0 : i32
    %c0_i32_1 = arith.constant 0 : i32
    return %c0_i32, %c0_i32_0 : i32, i32
  }
  func.func @transform_1(%arg0: i32) -> (i32, i32) {
    %c0_i32 = arith.constant 0 : i32
    %c0_i32_0 = arith.constant 0 : i32
    %c0_i32_1 = arith.constant 0 : i32
    return %c0_i32, %c0_i32_0 : i32, i32
  }
  func.func @transform_2(%arg0: i32) -> (i32, i32) {
    %c0_i32 = arith.constant 0 : i32
    %c0_i32_0 = arith.constant 0 : i32
    return %c0_i32, %arg0 : i32, i32
  }
  func.func @transform_3(%arg0: i32) -> (i32, i32) {
    %c0_i32 = arith.constant 0 : i32
    %c0_i32_0 = arith.constant 0 : i32
    return %c0_i32, %arg0 : i32, i32
  }
}

</mosaic_0001>

<llo_original>
// kernel: tpu_custom_call.1
$region0: #{tpu_custom_call.1}
  #allocation0 [shape = 'u32[]', space=smem, size = 0x4, offset = 0x4, fixed_abs, tag = 'smem constant byte address 0x4 - core index']
  #allocation1 [shape = 'u32[144,128]{1,0:T(1,128)}', space=vmem, size = 0x12000, scoped, tag = 'internal scratch']
  %s0 = inlined_call_operand.vmem [shape: f32[4,64], index: 0, kind: input, shape index: {}]
  %s1 = inlined_call_operand.vmem [shape: f32[4,1], index: 1, kind: input, shape index: {}]
  %s2 = inlined_call_operand.hbm [shape: f32[64,256], index: 2, kind: input, shape index: {}]
  %s3 = inlined_call_operand.hbm [shape: f32[4,256], index: 3, kind: output, shape index: {}]
  %s4 = sld [smem:[#allocation0]]
  $region26: #{tpu_custom_call.1} parent=0
    _
  %s6 = ssub.s32 1, %s4
  %s7 = scalar_select 0, %s6, %s4
  $region1: #{tpu_custom_call.1} parent=0
    #allocation2 [shape = 'u8[65536]{0}', space=vmem, size = 0x10000, scoped, tag = 'input window, operand 2, single buffered']
    #allocation3 [shape = 's32[1]{0}', space=sflag, size = 0x4, scoped, tag = 'scoped memory for tpu_custom_call.1']
    #allocation4 [shape = 's32[1]{0}', space=sflag, size = 0x4, scoped, tag = 'scoped memory for tpu_custom_call.1']
    #allocation5 [shape = 'u8[4096]{0}', space=vmem, size = 0x1000, scoped, tag = 'output window, operand 0, single buffered']
    %8 = vsyncpa [#allocation3], 0
    %9 = vsyncpa [#allocation4], 0
    // Predicated region
    $region2: #{tpu_custom_call.1} parent=1 // pred_check
      _
    $region3: #{tpu_custom_call.1} parent=1 // pred_check_branch
      %11 = sbr.rel (0) target = $region5
    $region4: #{tpu_custom_call.1} parent=1 // pred_region
      _
    $region5: #{tpu_custom_call.1} parent=1 // pred_fallthru
      _
    // Predicated region
    $region6: #{tpu_custom_call.1} parent=1 // pred_check
      _
    $region7: #{tpu_custom_call.1} parent=1 // pred_check_branch
      %13 = sbr.rel (0) target = $region9
    $region8: #{tpu_custom_call.1} parent=1 // pred_region
      _
    $region9: #{tpu_custom_call.1} parent=1 // pred_fallthru
      _
    // Predicated region
    $region10: #{tpu_custom_call.1} parent=1 // pred_check
      _
    $region11: #{tpu_custom_call.1} parent=1 // pred_check_branch
      %15 = sbr.rel (0) target = $region13
    $region12: #{tpu_custom_call.1} parent=1 // pred_region
      %s17 = ssub.s32 2048, 2048
      %18 = vsyncadd [#allocation3], %s17
      %s19 = sshll.u32 [#allocation2], 4
      %s20 = int_to_ptr.vmem [resolvable:$true] %s19
      %25 = dma.hbm_to_vmem [thread:$0]  %s2, 2048, %s20, [#allocation3], 256, 256, 16
    $region13: #{tpu_custom_call.1} parent=1 // pred_fallthru
      _
    // Predicated region
    $region14: #{tpu_custom_call.1} parent=1 // pred_check
      _
    $region15: #{tpu_custom_call.1} parent=1 // pred_check_branch
      %27 = sbr.rel (0) target = $region17
    $region16: #{tpu_custom_call.1} parent=1 // pred_region
      %28 = dma.done [#allocation3], 2048
    $region17: #{tpu_custom_call.1} parent=1 // pred_fallthru
      _
    %v29 = vld [vmem:[%s0] sm:$0xf]
    %v30 = vld [vmem:[#allocation2] sm:$0xff]
    %v31 = vld [vmem:[#allocation2 + $0x8] sm:$0xff]
    %v32 = vld [vmem:[#allocation2 + $0x10] sm:$0xff]
    %v33 = vld [vmem:[#allocation2 + $0x18] sm:$0xff]
    %v34 = vld [vmem:[#allocation2 + $0x20] sm:$0xff]
    %v35 = vld [vmem:[#allocation2 + $0x28] sm:$0xff]
    %v36 = vld [vmem:[#allocation2 + $0x30] sm:$0xff]
    %v37 = vld [vmem:[#allocation2 + $0x38] sm:$0xff]
    %v38 = vld [vmem:[#allocation2 + $0x40] sm:$0xff]
    %v39 = vld [vmem:[#allocation2 + $0x48] sm:$0xff]
    %v40 = vld [vmem:[#allocation2 + $0x50] sm:$0xff]
    %v41 = vld [vmem:[#allocation2 + $0x58] sm:$0xff]
    %v42 = vld [vmem:[#allocation2 + $0x60] sm:$0xff]
    %v43 = vld [vmem:[#allocation2 + $0x68] sm:$0xff]
    %v44 = vld [vmem:[#allocation2 + $0x70] sm:$0xff]
    %v45 = vld [vmem:[#allocation2 + $0x78] sm:$0xff]
    %v46 = vld [vmem:[%s1] sm:$0xf]
    %48 = vset.pattern.permute.xlu0 0
    %49 = vperm.xlu0 %48, %v46
    %v50 = vpop.permute.xlu0 %49
    %vm52 = vcmask 523264
    %v54 = vsel %vm52, %v29, 0
    %56 = vmatprep.subr.mxu0 0.0
    %57 = vmatpush1.msra.mxu0 0.0
    %58 = vmatprep.subr.mxu0 0.0
    %59 = vmatpush1.msra.mxu0 0.0
    %60 = vmatprep.subr.mxu0 0.0
    %61 = vmatpush1.msra.mxu0 0.0
    %62 = vmatprep.subr.mxu0 0.0
    %63 = vmatpush1.msra.mxu0 0.0
    %64 = vmatprep.subr.mxu0 0.0
    %65 = vmatpush1.msra.mxu0 0.0
    %66 = vmatprep.subr.mxu0 0.0
    %67 = vmatpush1.msra.mxu0 0.0
    %68 = vmatprep.subr.mxu0 0.0
    %69 = vmatpush1.msra.mxu0 0.0
    %70 = vmatprep.subr.mxu0 0.0
    %71 = vmatpush1.msra.mxu0 0.0
    %72 = vmatprep.subr.mxu0 %v45
    %73 = vmatpush1.msra.mxu0 %v44
    %74 = vmatprep.subr.mxu0 %v43
    %75 = vmatpush1.msra.mxu0 %v42
    %76 = vmatprep.subr.mxu0 %v41
    %77 = vmatpush1.msra.mxu0 %v40
    %78 = vmatprep.subr.mxu0 %v39
    %79 = vmatpush1.msra.mxu0 %v38
    %80 = vmatprep.subr.mxu0 %v37
    %81 = vmatpush1.msra.mxu0 %v36
    %82 = vmatprep.subr.mxu0 %v35
    %83 = vmatpush1.msra.mxu0 %v34
    %84 = vmatprep.subr.mxu0 %v33
    %85 = vmatpush1.msra.mxu0 %v32
    %86 = vmatprep.subr.mxu0 %v31
    %87 = vmatpush1.msra.mxu0 %v30
    %88 = vmatprep.subr.mxu0 0.0
    %89 = vmatpush2.msra.mxu0 0.0
    %90 = vmatprep.subr.mxu0 0.0
    %91 = vmatpush2.msra.mxu0 0.0
    %92 = vmatprep.subr.mxu0 0.0
    %93 = vmatpush2.msra.mxu0 0.0
    %94 = vmatprep.subr.mxu0 0.0
    %95 = vmatpush2.msra.mxu0 0.0
    %96 = vmatprep.subr.mxu0 0.0
    %97 = vmatpush2.msra.mxu0 0.0
    %98 = vmatprep.subr.mxu0 0.0
    %99 = vmatpush2.msra.mxu0 0.0
    %100 = vmatprep.subr.mxu0 0.0
    %101 = vmatpush2.msra.mxu0 0.0
    %102 = vmatprep.subr.mxu0 0.0
    %103 = vmatpush2.msra.mxu0 0.0
    %104 = vmatprep.subr.mxu0 0.0
    %105 = vmatpush2.msra.mxu0 0.0
    %106 = vmatprep.subr.mxu0 0.0
    %107 = vmatpush2.msra.mxu0 0.0
    %108 = vmatprep.subr.mxu0 0.0
    %109 = vmatpush2.msra.mxu0 0.0
    %110 = vmatprep.subr.mxu0 0.0
    %111 = vmatpush2.msra.mxu0 0.0
    %112 = vmatprep.subr.mxu0 0.0
    %113 = vmatpush2.msra.mxu0 0.0
    %114 = vmatprep.subr.mxu0 0.0
    %115 = vmatpush2.msra.mxu0 0.0
    %116 = vmatprep.subr.mxu0 0.0
    %117 = vmatpush2.msra.mxu0 0.0
    %118 = vmatprep.subr.mxu0 0.0
    %119 = vmatpush2.msra.mxu0 0.0
    %120 = vmatprep.mubr.f32.mxu0 0.0
    %121 = vmatmul.mubr.f32.gmra.mxu0 %v54
    %v122 = vpop.f32.mrf.mxu0
    %v123 = vadd.f32 %v50, %v122
    %v124 = vpop.f32.mrf.mxu0
    %v125 = vadd.f32 %v50, %v124
    %126 = vdwg.mxu0
    %v127 = vmax.f32 %v123, 1e-06
    %v128 = vmax.f32 %v125, 1e-06
    %v129 = vlog2.pop %v127
    %v130 = vmul.f32 %v129, 0.6931472
    %v131 = vlog2.pop %v128
    %v132 = vmul.f32 %v131, 0.6931472
    %v135 = vcombine.low %v130, %v132
    %137 = vst [vmem:[#allocation5] sm:$0xff] %v135
    // Predicated region
    $region18: #{tpu_custom_call.1} parent=1 // pred_check
      _
    $region19: #{tpu_custom_call.1} parent=1 // pred_check_branch
      %139 = sbr.rel (0) target = $region21
    $region20: #{tpu_custom_call.1} parent=1 // pred_region
      %s141 = ssub.s32 128, 128
      %142 = vsyncadd [#allocation4], %s141
      %s144 = sshll.u32 [#allocation5], 4
      %s145 = int_to_ptr.vmem [resolvable:$true] %s144
      %147 = dma.vmem_to_hbm [thread:$0]  %s145, 128, %s3, [#allocation4]
    $region21: #{tpu_custom_call.1} parent=1 // pred_fallthru
      _
    // Predicated region
    $region22: #{tpu_custom_call.1} parent=1 // pred_check
      _
    $region23: #{tpu_custom_call.1} parent=1 // pred_check_branch
      %149 = sbr.rel (0) target = $region25
    $region24: #{tpu_custom_call.1} parent=1 // pred_region
      %150 = dma.done [#allocation4], 128
    $region25: #{tpu_custom_call.1} parent=1 // pred_fallthru
      _
    %151 = vsyncpa [#allocation3], 1
    %152 = vsyncpa [#allocation4], 1

</llo_original>
